<compile_context>
chip_gen: v5e
topology: v5e:2x2
jax: 0.10.0
libtpu: 0.0.40
codegen_flags: <defaults>
</compile_context>

<pallas_src>
import jax
import jax.numpy as jnp
from jax.experimental import pallas as pl
from jax.experimental.pallas import tpu as pltpu


# ----------------------------------------------------------------------------
# Kernels
# ----------------------------------------------------------------------------

def _make_resident_kernel(cache_h):
    """Whole hidden dim resident: one pass, no reduction axis, no accumulator.

    cache_h=True  -> grid has >1 output tiles; fc1 result is cached in a VMEM
                     scratch at j==0 and reused for every output tile.
    cache_h=False -> single output tile; compute straight into o_ref.
    """
    if cache_h:
        def kernel(x_ref, w1_ref, b1_ref, w2_ref, b2_ref, o_ref, h_ref):
            @pl.when(pl.program_id(1) == 0)
            def _():
                h = jnp.dot(x_ref[...], w1_ref[...],
                            preferred_element_type=jnp.float32)
                h_ref[...] = jnp.maximum(h + b1_ref[...], 0.0).astype(h_ref.dtype)

            y = jnp.dot(h_ref[...], w2_ref[...],
                        preferred_element_type=jnp.float32)
            o_ref[...] = (y + b2_ref[...]).astype(o_ref.dtype)
    else:
        def kernel(x_ref, w1_ref, b1_ref, w2_ref, b2_ref, o_ref):
            h = jnp.dot(x_ref[...], w1_ref[...],
                        preferred_element_type=jnp.float32)
            h = jnp.maximum(h + b1_ref[...], 0.0).astype(w2_ref.dtype)
            y = jnp.dot(h, w2_ref[...], preferred_element_type=jnp.float32)
            o_ref[...] = (y + b2_ref[...]).astype(o_ref.dtype)
    return kernel


def mlp_kernel_acc(x_ref, w1_ref, b1_ref, w2_ref, b2_ref, o_ref, acc_ref):
    """Hidden dim tiled as a reduction (grid axis 2, last); f32 accumulator,
    b2 folded into accumulator init, writeback on the last hidden chunk."""
    k = pl.program_id(2)

    @pl.when(k == 0)
    def _():
        acc_ref[...] = jnp.broadcast_to(b2_ref[...], acc_ref.shape)

    h = jnp.dot(x_ref[...], w1_ref[...], preferred_element_type=jnp.float32)
    h = jnp.maximum(h + b1_ref[...], 0.0)
    acc_ref[...] += jnp.dot(h.astype(w2_ref.dtype), w2_ref[...],
                            preferred_element_type=jnp.float32)

    @pl.when(k == pl.num_programs(2) - 1)
    def _():
        o_ref[...] = acc_ref[...].astype(o_ref.dtype)


# ----------------------------------------------------------------------------
# Generation-aware sizing
# ----------------------------------------------------------------------------

def _round_up(x, m):
    return ((x + m - 1) // m) * m


def _tpu_config():
    kind = ""
    try:
        d = jax.devices()[0]
        if d.platform == "tpu":
            kind = d.device_kind.lower()
    except Exception:
        pass
    if "v7" in kind or "7x" in kind:
        # 64 MiB physical VMEM, 2 TensorCores, 256-wide MXU.
        return {"name": "v7x", "budget": 40 << 20, "vmem_limit": 48 << 20,
                "mxu": 256, "num_tc": 2}
    if "v6" in kind:
        return {"name": "v6e", "budget": 80 << 20, "vmem_limit": 100 << 20,
                "mxu": 256, "num_tc": 1}
    if "v5" in kind:
        return {"name": "v5e", "budget": 80 << 20, "vmem_limit": 100 << 20,
                "mxu": 128, "num_tc": 1}
    # Unknown device: conservative settings.
    return {"name": "unknown", "budget": 32 << 20, "vmem_limit": 48 << 20,
            "mxu": 128, "num_tc": 1}


def _derive_feature_tiles(H, D_out, cfg, th_cap=None, tn_cap=None):
    """Pick hidden (th) and output (tn) tiles + padded extents.  th/tn are
    128-multiples when tiled (lane constraint); th caps the live f32 h tile."""
    default_cap = max(cfg["mxu"], 512)
    th_cap = th_cap if th_cap is not None else default_cap
    tn_cap = tn_cap if tn_cap is not None else default_cap
    th_cap = max((th_cap // 128) * 128, 128)
    tn_cap = max((tn_cap // 128) * 128, 128)

    # Output features: lane-dense, >=128.
    D_out_pad = _round_up(D_out, 128)
    if D_out_pad <= tn_cap:
        tn = D_out_pad
    else:
        tn = tn_cap
        D_out_pad = _round_up(D_out_pad, tn)

    # Hidden: resident (th == H, no reduction axis) when it fits the cap.
    if H <= th_cap:
        th, H_pad = H, H
    else:
        th = th_cap
        H_pad = _round_up(H, th)
    return th, tn, H_pad, D_out_pad


def _derive_batch_tile(B, D_in, th, tn, in_isz, out_isz, cfg, tm_cap):
    """Largest batch tile that fits the VMEM budget (double-buffered blocks +
    accumulator/scratch + live f32 intermediate), MXU-aligned, with >= num_tc
    batch steps so the parallel axis can shard across TensorCores."""
    mxu, budget, num_tc = cfg["mxu"], cfg["budget"], cfg["num_tc"]

    # Double-buffered weight/bias block bytes (independent of tm).
    fixed = 2 * (D_in * th + th * tn) * in_isz + 2 * (th + tn) * 4
    # Per batch row: x/out blocks (x2 buffers), f32 acc tile, f32 h + cast copy.
    per_row = (2 * D_in * in_isz + 2 * tn * out_isz
               + tn * 4 + th * 4 + th * in_isz)
    avail = max(budget - fixed, per_row * 8)
    tm = min(avail // per_row, tm_cap)

    B_eff = _round_up(B, 8)
    if num_tc > 1:
        tm = min(tm, _round_up(-(-B_eff // num_tc), 8))  # >= num_tc steps
    tm = min(tm, B_eff)
    if tm >= mxu:
        tm = (tm // mxu) * mxu
    else:
        tm = max((tm // 8) * 8, 8)

    # Rebalance so the last tile isn't mostly padding.
    grid_m = -(-B_eff // tm)
    unit = mxu if tm >= mxu else 8
    tm = _round_up(-(-B_eff // grid_m), unit)
    B_pad = _round_up(B_eff, tm)
    return tm, B_pad


# ----------------------------------------------------------------------------
# Parameter prep (runs once) + forward
# ----------------------------------------------------------------------------

def prepare_ventas_params(w1, b1, w2, b2, *, use_bf16=True, cfg=None,
                          th_cap=None, tn_cap=None):
    """Pad & cast weights once, outside the per-call forward path.
    Weights are stored (in_features, out_features): y = x @ W + b."""
    cfg = cfg or _tpu_config()
    D_in, H = w1.shape
    D_out = w2.shape[1]
    th, tn, H_pad, D_out_pad = _derive_feature_tiles(H, D_out, cfg,
                                                     th_cap=th_cap,
                                                     tn_cap=tn_cap)
    wdt = jnp.bfloat16 if use_bf16 else jnp.float32
    w1p = jnp.pad(w1, ((0, 0), (0, H_pad - H))).astype(wdt)
    w2p = jnp.pad(w2, ((0, H_pad - H), (0, D_out_pad - D_out))).astype(wdt)
    b1p = jnp.pad(b1, (0, H_pad - H)).reshape(1, H_pad).astype(jnp.float32)
    b2p = jnp.pad(b2, (0, D_out_pad - D_out)).reshape(1, D_out_pad).astype(jnp.float32)
    return {"w1": w1p, "b1": b1p, "w2": w2p, "b2": b2p,
            "dims": (D_in, H, D_out, H_pad, D_out_pad),
            "tiles": (th, tn), "use_bf16": use_bf16, "cfg": cfg}


def ventas_model_forward(x, params, *, tm_cap=1024):
    cfg = params["cfg"]
    D_in, H, D_out, H_pad, D_out_pad = params["dims"]
    th, tn = params["tiles"]
    use_bf16 = params["use_bf16"]
    w1p, b1p, w2p, b2p = params["w1"], params["b1"], params["w2"], params["b2"]

    B = x.shape[0]
    out_dtype = x.dtype
    in_isz = 2 if use_bf16 else 4
    out_isz = jnp.dtype(out_dtype).itemsize
    tm, B_pad = _derive_batch_tile(B, D_in, th, tn, in_isz, out_isz, cfg, tm_cap)

    x_in = x.astype(jnp.bfloat16) if use_bf16 else x
    if B_pad != B:
        x_in = jnp.pad(x_in, ((0, B_pad - B), (0, 0)))

    grid_m = B_pad // tm
    grid_n = D_out_pad // tn
    grid_k = H_pad // th

    cost = pl.CostEstimate(
        flops=2 * B_pad * H_pad * (D_in + D_out_pad),
        transcendentals=0,
        bytes_accessed=(B_pad * D_in * in_isz
                        + (w1p.size + w2p.size) * in_isz
                        + (H_pad + D_out_pad) * 4
                        + B_pad * D_out_pad * out_isz))
    cparams = pltpu.CompilerParams(
        dimension_semantics=(("parallel", "arbitrary") if grid_k == 1
                             else ("parallel", "parallel", "arbitrary")),
        vmem_limit_bytes=cfg["vmem_limit"])

    if grid_k == 1:
        # Weights fully resident; no reduction axis, no accumulator scratch.
        cache_h = grid_n > 1
        out = pl.pallas_call(
            _make_resident_kernel(cache_h),
            out_shape=jax.ShapeDtypeStruct((B_pad, D_out_pad), out_dtype),
            grid=(grid_m, grid_n),
            in_specs=[
                pl.BlockSpec((tm, D_in), lambda i, j: (i, 0)),
                pl.BlockSpec((D_in, H_pad), lambda i, j: (0, 0)),   # resident
                pl.BlockSpec((1, H_pad), lambda i, j: (0, 0)),      # resident
                pl.BlockSpec((H_pad, tn), lambda i, j: (0, j)),
                pl.BlockSpec((1, tn), lambda i, j: (0, j)),
            ],
            out_specs=pl.BlockSpec((tm, tn), lambda i, j: (i, j)),
            scratch_shapes=([pltpu.VMEM((tm, H_pad), w2p.dtype)]
                            if cache_h else []),
            compiler_params=cparams,
            cost_estimate=cost,
        )(x_in, w1p, b1p, w2p, b2p)
    else:
        # Hidden dim tiled as the (last) reduction axis with f32 accumulator.
        out = pl.pallas_call(
            mlp_kernel_acc,
            out_shape=jax.ShapeDtypeStruct((B_pad, D_out_pad), out_dtype),
            grid=(grid_m, grid_n, grid_k),
            in_specs=[
                pl.BlockSpec((tm, D_in), lambda i, j, k: (i, 0)),
                pl.BlockSpec((D_in, th), lambda i, j, k: (0, k)),
                pl.BlockSpec((1, th), lambda i, j, k: (0, k)),
                pl.BlockSpec((th, tn), lambda i, j, k: (k, j)),
                pl.BlockSpec((1, tn), lambda i, j, k: (0, j)),
            ],
            out_specs=pl.BlockSpec((tm, tn), lambda i, j, k: (i, j)),
            scratch_shapes=[pltpu.VMEM((tm, tn), jnp.float32)],
            compiler_params=cparams,
            cost_estimate=cost,
        )(x_in, w1p, b1p, w2p, b2p)

    return out[:B, :D_out]


# ----------------------------------------------------------------------------
# Reference + init
# ----------------------------------------------------------------------------

def ref_forward(x, w1, b1, w2, b2, *, use_bf16):
    """Plain-JAX reference matching the kernel's dtype choices."""
    if use_bf16:
        xd, w1d, w2d = (a.astype(jnp.bfloat16) for a in (x, w1, w2))
    else:
        xd, w1d, w2d = x, w1, w2
    h = jnp.dot(xd, w1d, preferred_element_type=jnp.float32) + b1
    h = jnp.maximum(h, 0.0)
    y = jnp.dot(h.astype(w2d.dtype), w2d, preferred_element_type=jnp.float32) + b2
    return y.astype(x.dtype)


def init_linear(key, in_features, out_features, dtype=jnp.float32):
    """nn.Linear-style init U(-1/sqrt(fan_in), +1/sqrt(fan_in)), stored (in, out)."""
    kw, kb = jax.random.split(key)
    bound = 1.0 / (in_features ** 0.5)
    w = jax.random.uniform(kw, (in_features, out_features), dtype,
                           minval=-bound, maxval=bound)
    b = jax.random.uniform(kb, (out_features,), dtype,
                           minval=-bound, maxval=bound)
    return w, b


if __name__ == "__main__":
    key = jax.random.PRNGKey(0)
    k_x, k_fc1, k_fc2, k_x2, k_fc1b, k_fc2b = jax.random.split(key, 6)

    # Test 1: module-sized shapes (input_dim=8, hidden_dim=32, output_dim=4),
    # resident-weight single-pass kernel, f32 and bf16 paths.
    B, D_in, H, D_out = 32, 8, 32, 4
    x = jax.random.normal(k_x, (B, D_in), jnp.float32)
    w1, b1 = init_linear(k_fc1, D_in, H)
    w2, b2 = init_linear(k_fc2, H, D_out)

    p_f32 = prepare_ventas_params(w1, b1, w2, b2, use_bf16=False)
    out = jax.block_until_ready(ventas_model_forward(x, p_f32))
    ref = ref_forward(x, w1, b1, w2, b2, use_bf16=False)
    assert out.shape == (B, D_out)
    assert jnp.allclose(out, ref, atol=1e-5, rtol=1e-5), "f32 resident path mismatch"

    p_bf16 = prepare_ventas_params(w1, b1, w2, b2, use_bf16=True)
    out = jax.block_until_ready(ventas_model_forward(x, p_bf16))
    ref = ref_forward(x, w1, b1, w2, b2, use_bf16=True)
    assert jnp.allclose(out, ref, atol=2e-3, rtol=2e-3), "bf16 resident path mismatch"

    # Test 2: forced hidden-reduction + output tiling (accumulator kernel),
    # with zero-padded H (320->384), D_out (200->256) and small batch tiles.
    B2, H2, D_out2 = 48, 320, 200
    x2 = jax.random.normal(k_x2, (B2, D_in), jnp.float32)
    w1b, b1b = init_linear(k_fc1b, D_in, H2)
    w2b, b2b = init_linear(k_fc2b, H2, D_out2)
    p_kt = prepare_ventas_params(w1b, b1b, w2b, b2b, use_bf16=True,
                                 th_cap=128, tn_cap=128)
    out2 = jax.block_until_ready(ventas_model_forward(x2, p_kt, tm_cap=16))
    ref2 = ref_forward(x2, w1b, b1b, w2b, b2b, use_bf16=True)
    assert out2.shape == (B2, D_out2)
    assert jnp.allclose(out2, ref2, atol=2e-3, rtol=2e-3), "tiled acc path mismatch"

    # Test 3: resident weights with output tiling (fc1 activation cached in
    # VMEM scratch and reused across output tiles).
    H3, D_out3 = 64, 200
    w1c, b1c = init_linear(k_fc1, D_in, H3)
    w2c, b2c = init_linear(k_fc2, H3, D_out3)
    p_rn = prepare_ventas_params(w1c, b1c, w2c, b2c, use_bf16=True, tn_cap=128)
    out3 = jax.block_until_ready(ventas_model_forward(x, p_rn, tm_cap=16))
    ref3 = ref_forward(x, w1c, b1c, w2c, b2c, use_bf16=True)
    assert out3.shape == (B, D_out3)
    assert jnp.allclose(out3, ref3, atol=2e-3, rtol=2e-3), "N-tiled resident path mismatch"

    print("KERNEL_OK")
</pallas_src>

<mosaic_0001>
module attributes {stable_mosaic.version = 11 : i64} {
  func.func @kernel(%arg0: i32, %arg1: i32, %arg2: memref<32x8xf32, #tpu.memory_space<vmem>>, %arg3: memref<8x32xf32, #tpu.memory_space<vmem>>, %arg4: memref<1x32xf32, #tpu.memory_space<vmem>>, %arg5: memref<32x128xf32, #tpu.memory_space<vmem>>, %arg6: memref<1x128xf32, #tpu.memory_space<vmem>>, %arg7: memref<32x128xf32, #tpu.memory_space<vmem>>) attributes {dimension_semantics = [#tpu.dimension_semantics<parallel>, #tpu.dimension_semantics<arbitrary>], iteration_bounds = array<i64: 1, 1>, scalar_prefetch = 0 : i64, scratch_operands = 0 : i64, tpu.core_type = #tpu.core_type<tc>, window_params = [{transform_indices = @transform_0, window_bounds = array<i64: 32, 8>}, {pipeline_mode = #tpu.pipeline_mode<synchronous>, transform_indices = @transform_1, window_bounds = array<i64: 8, 32>}, {pipeline_mode = #tpu.pipeline_mode<synchronous>, transform_indices = @transform_2, window_bounds = array<i64: 1, 32>}, {transform_indices = @transform_3, window_bounds = array<i64: 32, 128>}, {transform_indices = @transform_4, window_bounds = array<i64: 1, 128>}, {transform_indices = @transform_5, window_bounds = array<i64: 32, 128>}]} {
    %c0 = arith.constant 0 : index
    %c0_0 = arith.constant 0 : index
    %0 = vector.load %arg2[%c0, %c0_0] : memref<32x8xf32, #tpu.memory_space<vmem>>, vector<32x8xf32>
    %c0_1 = arith.constant 0 : index
    %c0_2 = arith.constant 0 : index
    %1 = vector.load %arg3[%c0_1, %c0_2] : memref<8x32xf32, #tpu.memory_space<vmem>>, vector<8x32xf32>
    %cst = arith.constant dense<0.000000e+00> : vector<32x32xf32>
    %2 = tpu.matmul %0, %1, %cst {dimension_numbers = #tpu.dot_dimension_numbers<[1], [0], [0], [1], [0, 0, 1, 1], [], []>} : vector<32x8xf32>, vector<8x32xf32>, vector<32x32xf32> -> vector<32x32xf32>
    %c0_3 = arith.constant 0 : index
    %c0_4 = arith.constant 0 : index
    %3 = vector.load %arg4[%c0_3, %c0_4] : memref<1x32xf32, #tpu.memory_space<vmem>>, vector<1x32xf32>
    %4 = vector.broadcast %3 : vector<1x32xf32> to vector<32x32xf32>
    %5 = arith.addf %2, %4 : vector<32x32xf32>
    %cst_5 = arith.constant 0.000000e+00 : f32
    %6 = vector.broadcast %cst_5 : f32 to vector<32x32xf32>
    %7 = arith.maximumf %5, %6 : vector<32x32xf32>
    %c0_6 = arith.constant 0 : index
    %c0_7 = arith.constant 0 : index
    %8 = vector.load %arg5[%c0_6, %c0_7] : memref<32x128xf32, #tpu.memory_space<vmem>>, vector<32x128xf32>
    %cst_8 = arith.constant dense<0.000000e+00> : vector<32x128xf32>
    %9 = tpu.matmul %7, %8, %cst_8 {dimension_numbers = #tpu.dot_dimension_numbers<[1], [0], [0], [1], [0, 0, 1, 1], [], []>} : vector<32x32xf32>, vector<32x128xf32>, vector<32x128xf32> -> vector<32x128xf32>
    %c0_9 = arith.constant 0 : index
    %c0_10 = arith.constant 0 : index
    %10 = vector.load %arg6[%c0_9, %c0_10] : memref<1x128xf32, #tpu.memory_space<vmem>>, vector<1x128xf32>
    %11 = vector.broadcast %10 : vector<1x128xf32> to vector<32x128xf32>
    %12 = arith.addf %9, %11 : vector<32x128xf32>
    %c0_11 = arith.constant 0 : index
    %c0_12 = arith.constant 0 : index
    %13 = vector.load %arg7[%c0_11, %c0_12] : memref<32x128xf32, #tpu.memory_space<vmem>>, vector<32x128xf32>
    tpu.vector_store %arg7[%c0_11, %c0_12], %12 {strides = array<i32>} : memref<32x128xf32, #tpu.memory_space<vmem>>, vector<32x128xf32>,
    return
  }
  func.func @transform_0(%arg0: i32, %arg1: i32) -> (i32, i32) {
    %c0_i32 = arith.constant 0 : i32
    %c0_i32_0 = arith.constant 0 : i32
    return %arg0, %c0_i32 : i32, i32
  }
  func.func @transform_1(%arg0: i32, %arg1: i32) -> (i32, i32) {
    %c0_i32 = arith.constant 0 : i32
    %c0_i32_0 = arith.constant 0 : i32
    %c0_i32_1 = arith.constant 0 : i32
    return %c0_i32, %c0_i32_0 : i32, i32
  }
  func.func @transform_2(%arg0: i32, %arg1: i32) -> (i32, i32) {
    %c0_i32 = arith.constant 0 : i32
    %c0_i32_0 = arith.constant 0 : i32
    %c0_i32_1 = arith.constant 0 : i32
    return %c0_i32, %c0_i32_0 : i32, i32
  }
  func.func @transform_3(%arg0: i32, %arg1: i32) -> (i32, i32) {
    %c0_i32 = arith.constant 0 : i32
    %c0_i32_0 = arith.constant 0 : i32
    return %c0_i32, %arg1 : i32, i32
  }
  func.func @transform_4(%arg0: i32, %arg1: i32) -> (i32, i32) {
    %c0_i32 = arith.constant 0 : i32
    %c0_i32_0 = arith.constant 0 : i32
    return %c0_i32, %arg1 : i32, i32
  }
  func.func @transform_5(%arg0: i32, %arg1: i32) -> (i32, i32) {
    %c0_i32 = arith.constant 0 : i32
    return %arg0, %arg1 : i32, i32
  }
}

</mosaic_0001>

<llo_original>
// kernel: tpu_custom_call.1
$region0: #{tpu_custom_call.1}
  #allocation0 [shape = 'u32[]', space=smem, size = 0x4, offset = 0x4, fixed_abs, tag = 'smem constant byte address 0x4 - core index']
  #allocation1 [shape = 'u32[72,128]{1,0:T(1,128)}', space=vmem, size = 0x9000, scoped, tag = 'internal scratch']
  %s0 = inlined_call_operand.vmem [shape: f32[32,8], index: 0, kind: input, shape index: {}]
  %s1 = inlined_call_operand.vmem [shape: f32[8,32], index: 1, kind: input, shape index: {}]
  %s2 = inlined_call_operand.vmem [shape: f32[1,32], index: 2, kind: input, shape index: {}]
  %s3 = inlined_call_operand.vmem [shape: f32[32,128], index: 3, kind: input, shape index: {}]
  %s4 = inlined_call_operand.vmem [shape: f32[1,128], index: 4, kind: input, shape index: {}]
  %s5 = inlined_call_operand.hbm [shape: f32[32,128], index: 5, kind: output, shape index: {}]
  %s6 = sld [smem:[#allocation0]]
  $region30: #{tpu_custom_call.1} parent=0
    _
  %s8 = ssub.s32 1, %s6
  %s9 = scalar_select 0, %s8, %s6
  $region1: #{tpu_custom_call.1} parent=0
    #allocation2 [shape = 'u8[16384]{0}', space=vmem, size = 0x4000, scoped, tag = 'output window, operand 0, single buffered']
    #allocation3 [shape = 's32[1]{0}', space=sflag, size = 0x4, scoped, tag = 'scoped memory for tpu_custom_call.1']
    %10 = vsyncpa [#allocation3], 0
    // Predicated region
    $region2: #{tpu_custom_call.1} parent=1 // pred_check
      _
    $region3: #{tpu_custom_call.1} parent=1 // pred_check_branch
      %12 = sbr.rel (0) target = $region5
    $region4: #{tpu_custom_call.1} parent=1 // pred_region
      _
    $region5: #{tpu_custom_call.1} parent=1 // pred_fallthru
      _
    // Predicated region
    $region6: #{tpu_custom_call.1} parent=1 // pred_check
      _
    $region7: #{tpu_custom_call.1} parent=1 // pred_check_branch
      %14 = sbr.rel (0) target = $region9
    $region8: #{tpu_custom_call.1} parent=1 // pred_region
      _
    $region9: #{tpu_custom_call.1} parent=1 // pred_fallthru
      _
    // Predicated region
    $region10: #{tpu_custom_call.1} parent=1 // pred_check
      _
    $region11: #{tpu_custom_call.1} parent=1 // pred_check_branch
      %16 = sbr.rel (0) target = $region13
    $region12: #{tpu_custom_call.1} parent=1 // pred_region
      _
    $region13: #{tpu_custom_call.1} parent=1 // pred_fallthru
      _
    // Predicated region
    $region14: #{tpu_custom_call.1} parent=1 // pred_check
      _
    $region15: #{tpu_custom_call.1} parent=1 // pred_check_branch
      %18 = sbr.rel (0) target = $region17
    $region16: #{tpu_custom_call.1} parent=1 // pred_region
      _
    $region17: #{tpu_custom_call.1} parent=1 // pred_fallthru
      _
    // Predicated region
    $region18: #{tpu_custom_call.1} parent=1 // pred_check
      _
    $region19: #{tpu_custom_call.1} parent=1 // pred_check_branch
      %20 = sbr.rel (0) target = $region21
    $region20: #{tpu_custom_call.1} parent=1 // pred_region
      _
    $region21: #{tpu_custom_call.1} parent=1 // pred_fallthru
      _
    %v21 = vld [vmem:[%s0] sm:$0xff]
    %v22 = vld [vmem:[%s0 + $0x8] sm:$0xff]
    %v23 = vld [vmem:[%s0 + $0x10] sm:$0xff]
    %v24 = vld [vmem:[%s0 + $0x18] sm:$0xff]
    %v25 = vld [vmem:[%s1] sm:$0xff]
    %v26 = vld [vmem:[%s2] sm:$0x1]
    %v28 = vperm.slane %v26, 0
    %vm30 = vcmask 64512
    %v32 = vsel %vm30, %v21, 0
    %v35 = vsel %vm30, %v22, 0
    %v38 = vsel %vm30, %v23, 0
    %v41 = vsel %vm30, %v24, 0
    %43 = vmatpush.msra.mxu0 0.0
    %44 = vmatpush.msra.mxu0 0.0
    %45 = vmatpush.msra.mxu0 0.0
    %46 = vmatpush.msra.mxu0 0.0
    %47 = vmatpush.msra.mxu0 0.0
    %48 = vmatpush.msra.mxu0 0.0
    %49 = vmatpush.msra.mxu0 0.0
    %50 = vmatpush.msra.mxu0 0.0
    %51 = vmatpush.msra.mxu0 0.0
    %52 = vmatpush.msra.mxu0 0.0
    %53 = vmatpush.msra.mxu0 0.0
    %54 = vmatpush.msra.mxu0 0.0
    %55 = vmatpush.msra.mxu0 0.0
    %56 = vmatpush.msra.mxu0 0.0
    %57 = vmatpush.msra.mxu0 0.0
    %58 = vmatpush.msra.mxu0 %v25
    %59 = vmatmul.f32.gmra.mxu0 %v32
    %v60 = vpop.f32.mrf.mxu0
    %v61 = vadd.f32 %v28, %v60
    %62 = vmatmul.f32.gmra.mxu0 %v35
    %v63 = vpop.f32.mrf.mxu0
    %v64 = vadd.f32 %v28, %v63
    %65 = vmatmul.f32.gmra.mxu0 %v38
    %v66 = vpop.f32.mrf.mxu0
    %v67 = vadd.f32 %v28, %v66
    %68 = vmatmul.f32.gmra.mxu0 %v41
    %v69 = vpop.f32.mrf.mxu0
    %v70 = vadd.f32 %v28, %v69
    %71 = vdwg.mxu0
    %v72 = vmax.f32 %v61, 0.0
    %v73 = vmax.f32 %v64, 0.0
    %v74 = vmax.f32 %v67, 0.0
    %v75 = vmax.f32 %v70, 0.0
    %v76 = vld [vmem:[%s3] sm:$0xff]
    %v77 = vld [vmem:[%s3 + $0x8] sm:$0xff]
    %v78 = vld [vmem:[%s3 + $0x10] sm:$0xff]
    %v79 = vld [vmem:[%s3 + $0x18] sm:$0xff]
    %v80 = vld [vmem:[%s4] sm:$0x1]
    %v82 = vperm.slane %v80, 0
    %vm84 = vcmask 261120
    %v86 = vsel %vm84, %v72, 0
    %v89 = vsel %vm84, %v73, 0
    %v92 = vsel %vm84, %v74, 0
    %v95 = vsel %vm84, %v75, 0
    %97 = vmatpush.msra.mxu0 0.0
    %98 = vmatpush.msra.mxu0 0.0
    %99 = vmatpush.msra.mxu0 0.0
    %100 = vmatpush.msra.mxu0 0.0
    %101 = vmatpush.msra.mxu0 0.0
    %102 = vmatpush.msra.mxu0 0.0
    %103 = vmatpush.msra.mxu0 0.0
    %104 = vmatpush.msra.mxu0 0.0
    %105 = vmatpush.msra.mxu0 0.0
    %106 = vmatpush.msra.mxu0 0.0
    %107 = vmatpush.msra.mxu0 0.0
    %108 = vmatpush.msra.mxu0 0.0
    %109 = vmatpush.msra.mxu0 %v79
    %110 = vmatpush.msra.mxu0 %v78
    %111 = vmatpush.msra.mxu0 %v77
    %112 = vmatpush.msra.mxu0 %v76
    %113 = vmatmul.f32.gmra.mxu0 %v86
    %v114 = vpop.f32.mrf.mxu0
    %v115 = vadd.f32 %v82, %v114
    %116 = vmatmul.f32.gmra.mxu0 %v89
    %v117 = vpop.f32.mrf.mxu0
    %v118 = vadd.f32 %v82, %v117
    %119 = vmatmul.f32.gmra.mxu0 %v92
    %v120 = vpop.f32.mrf.mxu0
    %v121 = vadd.f32 %v82, %v120
    %122 = vmatmul.f32.gmra.mxu0 %v95
    %v123 = vpop.f32.mrf.mxu0
    %v124 = vadd.f32 %v82, %v123
    %125 = vdwg.mxu0
    %126 = vst [vmem:[#allocation2] sm:$0xff] %v115
    %127 = vst [vmem:[#allocation2 + $0x8] sm:$0xff] %v118
    %128 = vst [vmem:[#allocation2 + $0x10] sm:$0xff] %v121
    %129 = vst [vmem:[#allocation2 + $0x18] sm:$0xff] %v124
    // Predicated region
    $region22: #{tpu_custom_call.1} parent=1 // pred_check
      _
    $region23: #{tpu_custom_call.1} parent=1 // pred_check_branch
      %131 = sbr.rel (0) target = $region25
    $region24: #{tpu_custom_call.1} parent=1 // pred_region
      %133 = vsyncadd [#allocation3], 0
      %s134 = sshll.u32 [#allocation2], 4
      %s135 = int_to_ptr.vmem [resolvable:$true] %s134
      %s136 = sshll.u32 %s5, 4
      %s137 = int_to_ptr.hbm [resolvable:$true] %s136
      %142 = dma.vmem_to_hbm [thread:$0]  %s135, 512, %s137, [#allocation3], 128, 128, 8
    $region25: #{tpu_custom_call.1} parent=1 // pred_fallthru
      _
    // Predicated region
    $region26: #{tpu_custom_call.1} parent=1 // pred_check
      _
    $region27: #{tpu_custom_call.1} parent=1 // pred_check_branch
      %144 = sbr.rel (0) target = $region29
    $region28: #{tpu_custom_call.1} parent=1 // pred_region
      %146 = dma.done [#allocation3], 512
    $region29: #{tpu_custom_call.1} parent=1 // pred_fallthru
      _
    %147 = vsyncpa [#allocation3], 1

</llo_original>
